<compile_context>
chip_gen: v6e
topology: v6e:2x2x1
jax: 0.10.0
libtpu: 0.0.40
codegen_flags: <defaults>
</compile_context>

<pallas_src>
import jax
import jax.numpy as jnp
from jax.experimental import pallas as pl
from jax.experimental.pallas import tpu as pltpu


# ----------------------------- config (small) -----------------------------
B = 2            # batch
L = 8            # seq_len
C = 4            # enc_in
M = 4            # number of time-mark features (freq='h', embed='timeF')
D = 32           # d_model
PRED = 4         # pred_len
NUM_LAYERS = 2   # e_layers

T = B * L                 # tokens processed per launch
KEMB = 3 * C + M          # embedding input width (3 conv taps + time marks)
CP = C * PRED             # projection output width
WCOL = max(D, CP, T)      # common column width of the packed slab (= 32)


# ---------------------- packed-slab row layout (8-aligned) -----------------
def _pad8(n):
    return -(-n // 8) * 8


_cur = [0]


def _band(nrows):
    start = _cur[0]
    _cur[0] += _pad8(nrows)
    return start


OFF_SPREV = _band(T)                              # (T, T) shift(+1) permutation
OFF_SNEXT = _band(T)                              # (T, T) shift(-1) permutation
OFF_SEL = _band(B)                                # (B, T) last-token selection
OFF_WCP = _band(C)                                # conv tap k=0  (C, D)
OFF_WCC = _band(C)                                # conv tap k=1  (C, D)
OFF_WCN = _band(C)                                # conv tap k=2  (C, D)
OFF_WM = _band(M)                                 # time-feature linear (M, D)
OFF_POS = _band(T)                                # positional emb tiled (T, D)
OFF_WH = [_band(D) for _ in range(NUM_LAYERS)]    # hidden weights (D, D)
OFF_BH = [_band(T) for _ in range(NUM_LAYERS)]    # hidden biases, broadcast (T, D)
OFF_WP1 = _band(D)                                # proj weight 1 (D, D)
OFF_BP1 = _band(T)                                # proj bias 1, broadcast (T, D)
OFF_WP2 = _band(D)                                # proj weight 2 (D, CP)
OFF_BP2 = _band(T)                                # proj bias 2, broadcast (T, CP)
N_ROWS = _cur[0]                                  # 264


# ------------------------------- kernel -----------------------------------
def ann_kernel(x_ref, mark_ref, p_ref, out_ref):
    # x_ref   : (T, C)        flattened (B, L, C) tokens
    # mark_ref: (T, M)        flattened time-mark features
    # p_ref   : (N_ROWS, 32)  packed parameter slab
    # out_ref : (B, CP)
    f32 = jnp.float32

    def band(off, nrows, ncols):
        return p_ref[off:off + nrows, 0:ncols]

    def mm(a, b):
        return jnp.dot(a, b, preferred_element_type=f32)

    x = x_ref[...]
    mark = mark_ref[...]

    # Circular shift over the sequence axis done in-kernel as exact 0/1
    # permutation matmuls (per-batch wraparound baked into the matrices).
    x_prev = mm(band(OFF_SPREV, T, T), x)     # x[(t-1) mod L]
    x_next = mm(band(OFF_SNEXT, T, T), x)     # x[(t+1) mod L]

    # DataEmbedding: circular Conv1d(k=3, no bias) taps + TimeFeature linear
    # + positional embedding.
    # TODO(synk): dropout is identity in inference mode (not applied here).
    h = (mm(x_prev, band(OFF_WCP, C, D))
         + mm(x, band(OFF_WCC, C, D))
         + mm(x_next, band(OFF_WCN, C, D))
         + mm(mark, band(OFF_WM, M, D))
         + band(OFF_POS, T, D))

    # Hidden layers: Linear + ReLU, position-wise over all T tokens.
    for layer in range(NUM_LAYERS):
        h = jnp.maximum(
            mm(h, band(OFF_WH[layer], D, D)) + band(OFF_BH[layer], T, D), 0.0)

    # Projection head applied position-wise to all T rows (same single MXU
    # pass as 2 rows); the last token of each batch element is picked with
    # one selection matmul at the output write (no sublane gather).
    q = jnp.maximum(mm(h, band(OFF_WP1, D, D)) + band(OFF_BP1, T, D), 0.0)
    y = mm(q, band(OFF_WP2, D, CP)) + band(OFF_BP2, T, CP)
    out_ref[...] = mm(band(OFF_SEL, B, T), y)


# ------------------------------ wrapper ------------------------------------
@jax.jit
def ann_forward(x_enc, x_mark_enc, p_all):
    # Pure metadata reshapes only; every matmul / bias / ReLU / shift runs
    # inside the kernel.
    x_flat = x_enc.reshape(T, C)
    mark_flat = x_mark_enc.reshape(T, M)

    vmem = pl.BlockSpec(memory_space=pltpu.MemorySpace.VMEM)
    out = pl.pallas_call(
        ann_kernel,
        out_shape=jax.ShapeDtypeStruct((B, CP), jnp.float32),
        in_specs=[vmem, vmem, vmem],
        out_specs=vmem,
    )(x_flat, mark_flat, p_all)

    # Matches PyTorch: dec_out.view(B, pred_len, enc_in)
    return out.reshape(B, PRED, C)


# --------------------------- parameter setup -------------------------------
def make_positional_embedding(seq_len, d_model):
    position = jnp.arange(seq_len, dtype=jnp.float32)[:, None]
    div_term = jnp.exp(jnp.arange(0, d_model, 2, dtype=jnp.float32)
                       * (-jnp.log(10000.0) / d_model))
    pe = jnp.zeros((seq_len, d_model), dtype=jnp.float32)
    pe = pe.at[:, 0::2].set(jnp.sin(position * div_term))
    pe = pe.at[:, 1::2].set(jnp.cos(position * div_term))
    return pe


def make_params(key):
    keys = jax.random.split(key, 2 + 2 * NUM_LAYERS + 4)
    ki = iter(keys)
    scale = 0.1
    # TokenEmbedding conv weight (d_model, enc_in, 3), circular padding.
    w_conv = scale * jax.random.normal(next(ki), (D, C, 3), dtype=jnp.float32)
    # TimeFeatureEmbedding: Linear(M, D, bias=False), stored transposed (M, D).
    wm = scale * jax.random.normal(next(ki), (M, D), dtype=jnp.float32)
    hidden = []
    for _ in range(NUM_LAYERS):
        w = scale * jax.random.normal(next(ki), (D, D), dtype=jnp.float32)
        b = scale * jax.random.normal(next(ki), (D,), dtype=jnp.float32)
        hidden.append((w, b))
    wp1 = scale * jax.random.normal(next(ki), (D, D), dtype=jnp.float32)
    bp1 = scale * jax.random.normal(next(ki), (D,), dtype=jnp.float32)
    wp2 = scale * jax.random.normal(next(ki), (D, CP), dtype=jnp.float32)
    bp2 = scale * jax.random.normal(next(ki), (CP,), dtype=jnp.float32)
    return dict(w_conv=w_conv, wm=wm, hidden=hidden,
                wp1=wp1, bp1=bp1, wp2=wp2, bp2=bp2)


def pack_params(p):
    """Pack every constant (weights, biases, positional embedding, shift and
    selection matrices) into ONE slab, sliced statically in-kernel."""
    slab = jnp.zeros((N_ROWS, WCOL), dtype=jnp.float32)

    def put(s, off, mat):
        r, c = mat.shape
        return s.at[off:off + r, 0:c].set(mat.astype(jnp.float32))

    # Circular-shift permutation matrices (per-batch wraparound) and the
    # last-token selection matrix.
    idx = jnp.arange(T)
    t = idx % L
    n = idx // L
    src_prev = n * L + (t + L - 1) % L
    src_next = n * L + (t + 1) % L
    s_prev = jax.nn.one_hot(src_prev, T, dtype=jnp.float32)
    s_next = jax.nn.one_hot(src_next, T, dtype=jnp.float32)
    sel = jax.nn.one_hot(jnp.arange(B) * L + (L - 1), T, dtype=jnp.float32)

    # Positional embedding, pre-tiled over the batch (constant data).
    pos_t = jnp.tile(make_positional_embedding(L, D), (B, 1))

    w_conv = p["w_conv"]                 # (D, C, 3)
    wcp = w_conv[:, :, 0].T              # multiplies x[(t-1) mod L]
    wcc = w_conv[:, :, 1].T              # multiplies x[t]
    wcn = w_conv[:, :, 2].T              # multiplies x[(t+1) mod L]

    slab = put(slab, OFF_SPREV, s_prev)
    slab = put(slab, OFF_SNEXT, s_next)
    slab = put(slab, OFF_SEL, sel)
    slab = put(slab, OFF_WCP, wcp)
    slab = put(slab, OFF_WCC, wcc)
    slab = put(slab, OFF_WCN, wcn)
    slab = put(slab, OFF_WM, p["wm"])
    slab = put(slab, OFF_POS, pos_t)
    for layer, (w, b) in enumerate(p["hidden"]):
        slab = put(slab, OFF_WH[layer], w)
        slab = put(slab, OFF_BH[layer], jnp.tile(b[None, :], (T, 1)))
    slab = put(slab, OFF_WP1, p["wp1"])
    slab = put(slab, OFF_BP1, jnp.tile(p["bp1"][None, :], (T, 1)))
    slab = put(slab, OFF_WP2, p["wp2"])
    slab = put(slab, OFF_BP2, jnp.tile(p["bp2"][None, :], (T, 1)))
    return slab


# ------------------------ pure-JAX reference check -------------------------
def reference_forward(x_enc, x_mark_enc, p):
    pos = make_positional_embedding(L, D)
    w_conv = p["w_conv"]
    wcp = w_conv[:, :, 0].T
    wcc = w_conv[:, :, 1].T
    wcn = w_conv[:, :, 2].T
    x_prev = jnp.roll(x_enc, 1, axis=1)
    x_next = jnp.roll(x_enc, -1, axis=1)
    h = (x_prev @ wcp + x_enc @ wcc + x_next @ wcn
         + x_mark_enc @ p["wm"] + pos[None])
    for (w, b) in p["hidden"]:
        h = jnp.maximum(h @ w + b, 0.0)
    last = h[:, -1:, :]
    q = jnp.maximum(last @ p["wp1"] + p["bp1"], 0.0)
    q = q @ p["wp2"] + p["bp2"]
    return q.reshape(x_enc.shape[0], PRED, C)


# --------------------------------- main ------------------------------------
if __name__ == "__main__":
    key = jax.random.PRNGKey(0)
    k_x, k_mark, k_params = jax.random.split(key, 3)

    x_enc = jax.random.normal(k_x, (B, L, C), dtype=jnp.float32)
    x_mark_enc = jax.random.normal(k_mark, (B, L, M), dtype=jnp.float32)
    params = make_params(k_params)
    p_all = pack_params(params)

    out = ann_forward(x_enc, x_mark_enc, p_all)
    out = jax.block_until_ready(out)

    ref = reference_forward(x_enc, x_mark_enc, params)
    assert out.shape == (B, PRED, C), out.shape
    assert jnp.allclose(out, ref, atol=1e-4, rtol=1e-4), (
        float(jnp.max(jnp.abs(out - ref))))

    print("KERNEL_OK")
</pallas_src>

<mosaic_0001>
module attributes {stable_mosaic.version = 11 : i64} {
  func.func @ann_kernel(%arg0: memref<16x4xf32, #tpu.memory_space<vmem>>, %arg1: memref<16x4xf32, #tpu.memory_space<vmem>>, %arg2: memref<280x32xf32, #tpu.memory_space<vmem>>, %arg3: memref<2x16xf32, #tpu.memory_space<vmem>>) attributes {dimension_semantics = [], scalar_prefetch = 0 : i64, scratch_operands = 0 : i64, tpu.core_type = #tpu.core_type<tc>} {
    %c0 = arith.constant 0 : index
    %c0_0 = arith.constant 0 : index
    %0 = vector.load %arg0[%c0, %c0_0] : memref<16x4xf32, #tpu.memory_space<vmem>>, vector<16x4xf32>
    %c0_1 = arith.constant 0 : index
    %c0_2 = arith.constant 0 : index
    %1 = vector.load %arg1[%c0_1, %c0_2] : memref<16x4xf32, #tpu.memory_space<vmem>>, vector<16x4xf32>
    %c0_3 = arith.constant 0 : index
    %c0_4 = arith.constant 0 : index
    %2 = vector.load %arg2[%c0_3, %c0_4] : memref<280x32xf32, #tpu.memory_space<vmem>>, vector<16x16xf32>
    %cst = arith.constant dense<0.000000e+00> : vector<16x4xf32>
    %3 = tpu.matmul %2, %0, %cst {dimension_numbers = #tpu.dot_dimension_numbers<[1], [0], [0], [1], [0, 0, 1, 1], [], []>} : vector<16x16xf32>, vector<16x4xf32>, vector<16x4xf32> -> vector<16x4xf32>
    %c16 = arith.constant 16 : index
    %c0_5 = arith.constant 0 : index
    %4 = vector.load %arg2[%c16, %c0_5] : memref<280x32xf32, #tpu.memory_space<vmem>>, vector<16x16xf32>
    %cst_6 = arith.constant dense<0.000000e+00> : vector<16x4xf32>
    %5 = tpu.matmul %4, %0, %cst_6 {dimension_numbers = #tpu.dot_dimension_numbers<[1], [0], [0], [1], [0, 0, 1, 1], [], []>} : vector<16x16xf32>, vector<16x4xf32>, vector<16x4xf32> -> vector<16x4xf32>
    %c40 = arith.constant 40 : index
    %c0_7 = arith.constant 0 : index
    %6 = vector.load %arg2[%c40, %c0_7] : memref<280x32xf32, #tpu.memory_space<vmem>>, vector<4x32xf32>
    %cst_8 = arith.constant dense<0.000000e+00> : vector<16x32xf32>
    %7 = tpu.matmul %3, %6, %cst_8 {dimension_numbers = #tpu.dot_dimension_numbers<[1], [0], [0], [1], [0, 0, 1, 1], [], []>} : vector<16x4xf32>, vector<4x32xf32>, vector<16x32xf32> -> vector<16x32xf32>
    %c48 = arith.constant 48 : index
    %c0_9 = arith.constant 0 : index
    %8 = vector.load %arg2[%c48, %c0_9] : memref<280x32xf32, #tpu.memory_space<vmem>>, vector<4x32xf32>
    %cst_10 = arith.constant dense<0.000000e+00> : vector<16x32xf32>
    %9 = tpu.matmul %0, %8, %cst_10 {dimension_numbers = #tpu.dot_dimension_numbers<[1], [0], [0], [1], [0, 0, 1, 1], [], []>} : vector<16x4xf32>, vector<4x32xf32>, vector<16x32xf32> -> vector<16x32xf32>
    %10 = arith.addf %7, %9 : vector<16x32xf32>
    %c56 = arith.constant 56 : index
    %c0_11 = arith.constant 0 : index
    %11 = vector.load %arg2[%c56, %c0_11] : memref<280x32xf32, #tpu.memory_space<vmem>>, vector<4x32xf32>
    %cst_12 = arith.constant dense<0.000000e+00> : vector<16x32xf32>
    %12 = tpu.matmul %5, %11, %cst_12 {dimension_numbers = #tpu.dot_dimension_numbers<[1], [0], [0], [1], [0, 0, 1, 1], [], []>} : vector<16x4xf32>, vector<4x32xf32>, vector<16x32xf32> -> vector<16x32xf32>
    %13 = arith.addf %10, %12 : vector<16x32xf32>
    %c64 = arith.constant 64 : index
    %c0_13 = arith.constant 0 : index
    %14 = vector.load %arg2[%c64, %c0_13] : memref<280x32xf32, #tpu.memory_space<vmem>>, vector<4x32xf32>
    %cst_14 = arith.constant dense<0.000000e+00> : vector<16x32xf32>
    %15 = tpu.matmul %1, %14, %cst_14 {dimension_numbers = #tpu.dot_dimension_numbers<[1], [0], [0], [1], [0, 0, 1, 1], [], []>} : vector<16x4xf32>, vector<4x32xf32>, vector<16x32xf32> -> vector<16x32xf32>
    %16 = arith.addf %13, %15 : vector<16x32xf32>
    %c72 = arith.constant 72 : index
    %c0_15 = arith.constant 0 : index
    %17 = vector.load %arg2[%c72, %c0_15] : memref<280x32xf32, #tpu.memory_space<vmem>>, vector<16x32xf32>
    %18 = arith.addf %16, %17 : vector<16x32xf32>
    %c88 = arith.constant 88 : index
    %c0_16 = arith.constant 0 : index
    %19 = vector.load %arg2[%c88, %c0_16] : memref<280x32xf32, #tpu.memory_space<vmem>>, vector<32x32xf32>
    %cst_17 = arith.constant dense<0.000000e+00> : vector<16x32xf32>
    %20 = tpu.matmul %18, %19, %cst_17 {dimension_numbers = #tpu.dot_dimension_numbers<[1], [0], [0], [1], [0, 0, 1, 1], [], []>} : vector<16x32xf32>, vector<32x32xf32>, vector<16x32xf32> -> vector<16x32xf32>
    %c152 = arith.constant 152 : index
    %c0_18 = arith.constant 0 : index
    %21 = vector.load %arg2[%c152, %c0_18] : memref<280x32xf32, #tpu.memory_space<vmem>>, vector<16x32xf32>
    %22 = arith.addf %20, %21 : vector<16x32xf32>
    %cst_19 = arith.constant 0.000000e+00 : f32
    %23 = vector.broadcast %cst_19 : f32 to vector<16x32xf32>
    %24 = arith.maximumf %22, %23 : vector<16x32xf32>
    %c120 = arith.constant 120 : index
    %c0_20 = arith.constant 0 : index
    %25 = vector.load %arg2[%c120, %c0_20] : memref<280x32xf32, #tpu.memory_space<vmem>>, vector<32x32xf32>
    %cst_21 = arith.constant dense<0.000000e+00> : vector<16x32xf32>
    %26 = tpu.matmul %24, %25, %cst_21 {dimension_numbers = #tpu.dot_dimension_numbers<[1], [0], [0], [1], [0, 0, 1, 1], [], []>} : vector<16x32xf32>, vector<32x32xf32>, vector<16x32xf32> -> vector<16x32xf32>
    %c168 = arith.constant 168 : index
    %c0_22 = arith.constant 0 : index
    %27 = vector.load %arg2[%c168, %c0_22] : memref<280x32xf32, #tpu.memory_space<vmem>>, vector<16x32xf32>
    %28 = arith.addf %26, %27 : vector<16x32xf32>
    %cst_23 = arith.constant 0.000000e+00 : f32
    %29 = vector.broadcast %cst_23 : f32 to vector<16x32xf32>
    %30 = arith.maximumf %28, %29 : vector<16x32xf32>
    %c184 = arith.constant 184 : index
    %c0_24 = arith.constant 0 : index
    %31 = vector.load %arg2[%c184, %c0_24] : memref<280x32xf32, #tpu.memory_space<vmem>>, vector<32x32xf32>
    %cst_25 = arith.constant dense<0.000000e+00> : vector<16x32xf32>
    %32 = tpu.matmul %30, %31, %cst_25 {dimension_numbers = #tpu.dot_dimension_numbers<[1], [0], [0], [1], [0, 0, 1, 1], [], []>} : vector<16x32xf32>, vector<32x32xf32>, vector<16x32xf32> -> vector<16x32xf32>
    %c216 = arith.constant 216 : index
    %c0_26 = arith.constant 0 : index
    %33 = vector.load %arg2[%c216, %c0_26] : memref<280x32xf32, #tpu.memory_space<vmem>>, vector<16x32xf32>
    %34 = arith.addf %32, %33 : vector<16x32xf32>
    %cst_27 = arith.constant 0.000000e+00 : f32
    %35 = vector.broadcast %cst_27 : f32 to vector<16x32xf32>
    %36 = arith.maximumf %34, %35 : vector<16x32xf32>
    %c232 = arith.constant 232 : index
    %c0_28 = arith.constant 0 : index
    %37 = vector.load %arg2[%c232, %c0_28] : memref<280x32xf32, #tpu.memory_space<vmem>>, vector<32x16xf32>
    %cst_29 = arith.constant dense<0.000000e+00> : vector<16x16xf32>
    %38 = tpu.matmul %36, %37, %cst_29 {dimension_numbers = #tpu.dot_dimension_numbers<[1], [0], [0], [1], [0, 0, 1, 1], [], []>} : vector<16x32xf32>, vector<32x16xf32>, vector<16x16xf32> -> vector<16x16xf32>
    %c264 = arith.constant 264 : index
    %c0_30 = arith.constant 0 : index
    %39 = vector.load %arg2[%c264, %c0_30] : memref<280x32xf32, #tpu.memory_space<vmem>>, vector<16x16xf32>
    %40 = arith.addf %38, %39 : vector<16x16xf32>
    %c32 = arith.constant 32 : index
    %c0_31 = arith.constant 0 : index
    %41 = vector.load %arg2[%c32, %c0_31] : memref<280x32xf32, #tpu.memory_space<vmem>>, vector<2x16xf32>
    %cst_32 = arith.constant dense<0.000000e+00> : vector<2x16xf32>
    %42 = tpu.matmul %41, %40, %cst_32 {dimension_numbers = #tpu.dot_dimension_numbers<[1], [0], [0], [1], [0, 0, 1, 1], [], []>} : vector<2x16xf32>, vector<16x16xf32>, vector<2x16xf32> -> vector<2x16xf32>
    %c0_33 = arith.constant 0 : index
    %c0_34 = arith.constant 0 : index
    %43 = vector.load %arg3[%c0_33, %c0_34] : memref<2x16xf32, #tpu.memory_space<vmem>>, vector<2x16xf32>
    tpu.vector_store %arg3[%c0_33, %c0_34], %42 {strides = array<i32>} : memref<2x16xf32, #tpu.memory_space<vmem>>, vector<2x16xf32>,
    return
  }
}

</mosaic_0001>

<llo_original>
// kernel: ann_forward.1
$region0: #{ann_forward.1}
  #allocation0 [shape = 'u32[]', space=smem, size = 0x4, offset = 0x4, fixed_abs, tag = 'smem constant byte address 0x4 - core index']
  #allocation1 [shape = 'u32[144,128]{1,0:T(1,128)}', space=vmem, size = 0x12000, scoped, tag = 'internal scratch']
  %s0 = inlined_call_operand.vmem [shape: f32[16,4], index: 0, kind: input, shape index: {}]
  %s1 = inlined_call_operand.vmem [shape: f32[16,4], index: 1, kind: input, shape index: {}]
  %s2 = inlined_call_operand.vmem [shape: f32[280,32], index: 2, kind: input, shape index: {}]
  %s3 = inlined_call_operand.vmem [shape: f32[2,16], index: 3, kind: output, shape index: {}]
  %s4 = sld [smem:[#allocation0]]
  $region22: #{ann_forward.1} parent=0
    _
  %s6 = ssub.s32 1, %s4
  %s7 = scalar_select 0, %s6, %s4
  // Predicated region
  $region2: #{ann_forward.1} parent=0 // pred_check
    _
  $region3: #{ann_forward.1} parent=0 // pred_check_branch
    %9 = sbr.rel (0) target = $region5
  $region4: #{ann_forward.1} parent=0 // pred_region
    _
  $region5: #{ann_forward.1} parent=0 // pred_fallthru
    _
  // Predicated region
  $region6: #{ann_forward.1} parent=0 // pred_check
    _
  $region7: #{ann_forward.1} parent=0 // pred_check_branch
    %11 = sbr.rel (0) target = $region9
  $region8: #{ann_forward.1} parent=0 // pred_region
    _
  $region9: #{ann_forward.1} parent=0 // pred_fallthru
    _
  // Predicated region
  $region10: #{ann_forward.1} parent=0 // pred_check
    _
  $region11: #{ann_forward.1} parent=0 // pred_check_branch
    %13 = sbr.rel (0) target = $region13
  $region12: #{ann_forward.1} parent=0 // pred_region
    _
  $region13: #{ann_forward.1} parent=0 // pred_fallthru
    _
  %v14 = vld [vmem:[%s0] sm:$0xff]
  %v15 = vld [vmem:[%s0 + $0x8] sm:$0xff]
  %v16 = vld [vmem:[%s1] sm:$0xff]
  %v17 = vld [vmem:[%s1 + $0x8] sm:$0xff]
  %v18 = vld [vmem:[%s2] sm:$0xff]
  %v19 = vld [vmem:[%s2 + $0x8] sm:$0xff]
  %vm20 = vcmask 130048
  %v22 = vsel %vm20, %v18, 0
  %v25 = vsel %vm20, %v19, 0
  %27 = vmatprep.subr.mxu0 0.0
  %28 = vmatpush1.msra.mxu0 0.0
  %29 = vmatprep.subr.mxu0 0.0
  %30 = vmatpush1.msra.mxu0 0.0
  %31 = vmatprep.subr.mxu0 0.0
  %32 = vmatpush1.msra.mxu0 0.0
  %33 = vmatprep.subr.mxu0 0.0
  %34 = vmatpush1.msra.mxu0 0.0
  %35 = vmatprep.subr.mxu0 0.0
  %36 = vmatpush1.msra.mxu0 0.0
  %37 = vmatprep.subr.mxu0 0.0
  %38 = vmatpush1.msra.mxu0 0.0
  %39 = vmatprep.subr.mxu0 0.0
  %40 = vmatpush1.msra.mxu0 0.0
  %41 = vmatprep.subr.mxu0 0.0
  %42 = vmatpush1.msra.mxu0 0.0
  %43 = vmatprep.subr.mxu0 0.0
  %44 = vmatpush1.msra.mxu0 0.0
  %45 = vmatprep.subr.mxu0 0.0
  %46 = vmatpush1.msra.mxu0 0.0
  %47 = vmatprep.subr.mxu0 0.0
  %48 = vmatpush1.msra.mxu0 0.0
  %49 = vmatprep.subr.mxu0 0.0
  %50 = vmatpush1.msra.mxu0 0.0
  %51 = vmatprep.subr.mxu0 0.0
  %52 = vmatpush1.msra.mxu0 0.0
  %53 = vmatprep.subr.mxu0 0.0
  %54 = vmatpush1.msra.mxu0 0.0
  %55 = vmatprep.subr.mxu0 0.0
  %56 = vmatpush1.msra.mxu0 %v15
  %57 = vmatprep.subr.mxu0 0.0
  %58 = vmatpush1.msra.mxu0 %v14
  %59 = vmatprep.subr.mxu0 0.0
  %60 = vmatpush2.msra.mxu0 0.0
  %61 = vmatprep.subr.mxu0 0.0
  %62 = vmatpush2.msra.mxu0 0.0
  %63 = vmatprep.subr.mxu0 0.0
  %64 = vmatpush2.msra.mxu0 0.0
  %65 = vmatprep.subr.mxu0 0.0
  %66 = vmatpush2.msra.mxu0 0.0
  %67 = vmatprep.subr.mxu0 0.0
  %68 = vmatpush2.msra.mxu0 0.0
  %69 = vmatprep.subr.mxu0 0.0
  %70 = vmatpush2.msra.mxu0 0.0
  %71 = vmatprep.subr.mxu0 0.0
  %72 = vmatpush2.msra.mxu0 0.0
  %73 = vmatprep.subr.mxu0 0.0
  %74 = vmatpush2.msra.mxu0 0.0
  %75 = vmatprep.subr.mxu0 0.0
  %76 = vmatpush2.msra.mxu0 0.0
  %77 = vmatprep.subr.mxu0 0.0
  %78 = vmatpush2.msra.mxu0 0.0
  %79 = vmatprep.subr.mxu0 0.0
  %80 = vmatpush2.msra.mxu0 0.0
  %81 = vmatprep.subr.mxu0 0.0
  %82 = vmatpush2.msra.mxu0 0.0
  %83 = vmatprep.subr.mxu0 0.0
  %84 = vmatpush2.msra.mxu0 0.0
  %85 = vmatprep.subr.mxu0 0.0
  %86 = vmatpush2.msra.mxu0 0.0
  %87 = vmatprep.subr.mxu0 0.0
  %88 = vmatpush2.msra.mxu0 0.0
  %89 = vmatprep.subr.mxu0 0.0
  %90 = vmatpush2.msra.mxu0 0.0
  %91 = vmatprep.mubr.f32.mxu0 0.0
  %92 = vmatmul.mubr.f32.gmra.mxu0 %v22
  %v93 = vpop.f32.mrf.mxu0
  %v94 = vadd.f32 0.0, %v93
  %v95 = vpop.f32.mrf.mxu0
  %96 = vmatprep.mubr.f32.mxu0 0.0
  %97 = vmatmul.mubr.f32.gmra.mxu0 %v25
  %v98 = vpop.f32.mrf.mxu0
  %v99 = vadd.f32 0.0, %v98
  %v100 = vpop.f32.mrf.mxu0
  %101 = vdwg.mxu0
  %v102 = vld [vmem:[%s2 + $0x10] sm:$0xff]
  %v103 = vld [vmem:[%s2 + $0x18] sm:$0xff]
  %v105 = vsel %vm20, %v102, 0
  %v108 = vsel %vm20, %v103, 0
  %110 = vmatprep.subr.mxu0 0.0
  %111 = vmatpush1.msra.mxu0 0.0
  %112 = vmatprep.subr.mxu0 0.0
  %113 = vmatpush1.msra.mxu0 0.0
  %114 = vmatprep.subr.mxu0 0.0
  %115 = vmatpush1.msra.mxu0 0.0
  %116 = vmatprep.subr.mxu0 0.0
  %117 = vmatpush1.msra.mxu0 0.0
  %118 = vmatprep.subr.mxu0 0.0
  %119 = vmatpush1.msra.mxu0 0.0
  %120 = vmatprep.subr.mxu0 0.0
  %121 = vmatpush1.msra.mxu0 0.0
  %122 = vmatprep.subr.mxu0 0.0
  %123 = vmatpush1.msra.mxu0 0.0
  %124 = vmatprep.subr.mxu0 0.0
  %125 = vmatpush1.msra.mxu0 0.0
  %126 = vmatprep.subr.mxu0 0.0
  %127 = vmatpush1.msra.mxu0 0.0
  %128 = vmatprep.subr.mxu0 0.0
  %129 = vmatpush1.msra.mxu0 0.0
  %130 = vmatprep.subr.mxu0 0.0
  %131 = vmatpush1.msra.mxu0 0.0
  %132 = vmatprep.subr.mxu0 0.0
  %133 = vmatpush1.msra.mxu0 0.0
  %134 = vmatprep.subr.mxu0 0.0
  %135 = vmatpush1.msra.mxu0 0.0
  %136 = vmatprep.subr.mxu0 0.0
  %137 = vmatpush1.msra.mxu0 0.0
  %138 = vmatprep.subr.mxu0 0.0
  %139 = vmatpush1.msra.mxu0 %v15
  %140 = vmatprep.subr.mxu0 0.0
  %141 = vmatpush1.msra.mxu0 %v14
  %142 = vmatprep.subr.mxu0 0.0
  %143 = vmatpush2.msra.mxu0 0.0
  %144 = vmatprep.subr.mxu0 0.0
  %145 = vmatpush2.msra.mxu0 0.0
  %146 = vmatprep.subr.mxu0 0.0
  %147 = vmatpush2.msra.mxu0 0.0
  %148 = vmatprep.subr.mxu0 0.0
  %149 = vmatpush2.msra.mxu0 0.0
  %150 = vmatprep.subr.mxu0 0.0
  %151 = vmatpush2.msra.mxu0 0.0
  %152 = vmatprep.subr.mxu0 0.0
  %153 = vmatpush2.msra.mxu0 0.0
  %154 = vmatprep.subr.mxu0 0.0
  %155 = vmatpush2.msra.mxu0 0.0
  %156 = vmatprep.subr.mxu0 0.0
  %157 = vmatpush2.msra.mxu0 0.0
  %158 = vmatprep.subr.mxu0 0.0
  %159 = vmatpush2.msra.mxu0 0.0
  %160 = vmatprep.subr.mxu0 0.0
  %161 = vmatpush2.msra.mxu0 0.0
  %162 = vmatprep.subr.mxu0 0.0
  %163 = vmatpush2.msra.mxu0 0.0
  %164 = vmatprep.subr.mxu0 0.0
  %165 = vmatpush2.msra.mxu0 0.0
  %166 = vmatprep.subr.mxu0 0.0
  %167 = vmatpush2.msra.mxu0 0.0
  %168 = vmatprep.subr.mxu0 0.0
  %169 = vmatpush2.msra.mxu0 0.0
  %170 = vmatprep.subr.mxu0 0.0
  %171 = vmatpush2.msra.mxu0 0.0
  %172 = vmatprep.subr.mxu0 0.0
  %173 = vmatpush2.msra.mxu0 0.0
  %174 = vmatprep.mubr.f32.mxu0 0.0
  %175 = vmatmul.mubr.f32.gmra.mxu0 %v105
  %v176 = vpop.f32.mrf.mxu0
  %v177 = vadd.f32 0.0, %v176
  %v178 = vpop.f32.mrf.mxu0
  %179 = vmatprep.mubr.f32.mxu0 0.0
  %180 = vmatmul.mubr.f32.gmra.mxu0 %v108
  %v181 = vpop.f32.mrf.mxu0
  %v182 = vadd.f32 0.0, %v181
  %v183 = vpop.f32.mrf.mxu0
  %184 = vdwg.mxu0
  %v185 = vld [vmem:[%s2 + $0x28] sm:$0xf]
  %v186 = vld [vmem:[%s2 + $0x30] sm:$0xf]
  %vm187 = vcmask 31744
  %v189 = vsel %vm187, %v14, 0
  %v192 = vsel %vm187, %v15, 0
  %vm194 = vcmask 1043456
  %v196 = vsel %vm194, %v186, 0
  %198 = vmatprep.subr.mxu0 0.0
  %199 = vmatpush1.msra.mxu0 0.0
  %200 = vmatprep.subr.mxu0 0.0
  %201 = vmatpush1.msra.mxu0 0.0
  %202 = vmatprep.subr.mxu0 0.0
  %203 = vmatpush1.msra.mxu0 0.0
  %204 = vmatprep.subr.mxu0 0.0
  %205 = vmatpush1.msra.mxu0 0.0
  %206 = vmatprep.subr.mxu0 0.0
  %207 = vmatpush1.msra.mxu0 0.0
  %208 = vmatprep.subr.mxu0 0.0
  %209 = vmatpush1.msra.mxu0 0.0
  %210 = vmatprep.subr.mxu0 0.0
  %211 = vmatpush1.msra.mxu0 0.0
  %212 = vmatprep.subr.mxu0 0.0
  %213 = vmatpush1.msra.mxu0 0.0
  %214 = vmatprep.subr.mxu0 0.0
  %215 = vmatpush1.msra.mxu0 0.0
  %216 = vmatprep.subr.mxu0 0.0
  %217 = vmatpush1.msra.mxu0 0.0
  %218 = vmatprep.subr.mxu0 0.0
  %219 = vmatpush1.msra.mxu0 0.0
  %220 = vmatprep.subr.mxu0 0.0
  %221 = vmatpush1.msra.mxu0 0.0
  %222 = vmatprep.subr.mxu0 0.0
  %223 = vmatpush1.msra.mxu0 0.0
  %224 = vmatprep.subr.mxu0 0.0
  %225 = vmatpush1.msra.mxu0 0.0
  %226 = vmatprep.subr.mxu0 0.0
  %227 = vmatpush1.msra.mxu0 0.0
  %228 = vmatprep.subr.mxu0 0.0
  %229 = vmatpush1.msra.mxu0 %v196
  %230 = vmatprep.subr.mxu0 0.0
  %231 = vmatpush2.msra.mxu0 0.0
  %232 = vmatprep.subr.mxu0 0.0
  %233 = vmatpush2.msra.mxu0 0.0
  %234 = vmatprep.subr.mxu0 0.0
  %235 = vmatpush2.msra.mxu0 0.0
  %236 = vmatprep.subr.mxu0 0.0
  %237 = vmatpush2.msra.mxu0 0.0
  %238 = vmatprep.subr.mxu0 0.0
  %239 = vmatpush2.msra.mxu0 0.0
  %240 = vmatprep.subr.mxu0 0.0
  %241 = vmatpush2.msra.mxu0 0.0
  %242 = vmatprep.subr.mxu0 0.0
  %243 = vmatpush2.msra.mxu0 0.0
  %244 = vmatprep.subr.mxu0 0.0
  %245 = vmatpush2.msra.mxu0 0.0
  %246 = vmatprep.subr.mxu0 0.0
  %247 = vmatpush2.msra.mxu0 0.0
  %248 = vmatprep.subr.mxu0 0.0
  %249 = vmatpush2.msra.mxu0 0.0
  %250 = vmatprep.subr.mxu0 0.0
  %251 = vmatpush2.msra.mxu0 0.0
  %252 = vmatprep.subr.mxu0 0.0
  %253 = vmatpush2.msra.mxu0 0.0
  %254 = vmatprep.subr.mxu0 0.0
  %255 = vmatpush2.msra.mxu0 0.0
  %256 = vmatprep.subr.mxu0 0.0
  %257 = vmatpush2.msra.mxu0 0.0
  %258 = vmatprep.subr.mxu0 0.0
  %259 = vmatpush2.msra.mxu0 0.0
  %260 = vmatprep.subr.mxu0 0.0
  %261 = vmatpush2.msra.mxu0 0.0
  %262 = vmatprep.mubr.f32.mxu0 0.0
  %263 = vmatmul.mubr.f32.gmra.mxu0 %v189
  %v264 = vpop.f32.mrf.mxu0
  %v265 = vadd.f32 0.0, %v264
  %v266 = vpop.f32.mrf.mxu0
  %267 = vmatprep.mubr.f32.mxu0 0.0
  %268 = vmatmul.mubr.f32.gmra.mxu0 %v192
  %v269 = vpop.f32.mrf.mxu0
  %v270 = vadd.f32 0.0, %v269
  %v271 = vpop.f32.mrf.mxu0
  %272 = vdwg.mxu0
  %v274 = vsel %vm187, %v94, 0
  %v277 = vsel %vm187, %v99, 0
  %v280 = vsel %vm194, %v185, 0
  %282 = vmatprep.subr.mxu0 0.0
  %283 = vmatpush1.msra.mxu0 0.0
  %284 = vmatprep.subr.mxu0 0.0
  %285 = vmatpush1.msra.mxu0 0.0
  %286 = vmatprep.subr.mxu0 0.0
  %287 = vmatpush1.msra.mxu0 0.0
  %288 = vmatprep.subr.mxu0 0.0
  %289 = vmatpush1.msra.mxu0 0.0
  %290 = vmatprep.subr.mxu0 0.0
  %291 = vmatpush1.msra.mxu0 0.0
  %292 = vmatprep.subr.mxu0 0.0
  %293 = vmatpush1.msra.mxu0 0.0
  %294 = vmatprep.subr.mxu0 0.0
  %295 = vmatpush1.msra.mxu0 0.0
  %296 = vmatprep.subr.mxu0 0.0
  %297 = vmatpush1.msra.mxu0 0.0
  %298 = vmatprep.subr.mxu0 0.0
  %299 = vmatpush1.msra.mxu0 0.0
  %300 = vmatprep.subr.mxu0 0.0
  %301 = vmatpush1.msra.mxu0 0.0
  %302 = vmatprep.subr.mxu0 0.0
  %303 = vmatpush1.msra.mxu0 0.0
  %304 = vmatprep.subr.mxu0 0.0
  %305 = vmatpush1.msra.mxu0 0.0
  %306 = vmatprep.subr.mxu0 0.0
  %307 = vmatpush1.msra.mxu0 0.0
  %308 = vmatprep.subr.mxu0 0.0
  %309 = vmatpush1.msra.mxu0 0.0
  %310 = vmatprep.subr.mxu0 0.0
  %311 = vmatpush1.msra.mxu0 0.0
  %312 = vmatprep.subr.mxu0 0.0
  %313 = vmatpush1.msra.mxu0 %v280
  %314 = vmatprep.subr.mxu0 0.0
  %315 = vmatpush2.msra.mxu0 0.0
  %316 = vmatprep.subr.mxu0 0.0
  %317 = vmatpush2.msra.mxu0 0.0
  %318 = vmatprep.subr.mxu0 0.0
  %319 = vmatpush2.msra.mxu0 0.0
  %320 = vmatprep.subr.mxu0 0.0
  %321 = vmatpush2.msra.mxu0 0.0
  %322 = vmatprep.subr.mxu0 0.0
  %323 = vmatpush2.msra.mxu0 0.0
  %324 = vmatprep.subr.mxu0 0.0
  %325 = vmatpush2.msra.mxu0 0.0
  %326 = vmatprep.subr.mxu0 0.0
  %327 = vmatpush2.msra.mxu0 0.0
  %328 = vmatprep.subr.mxu0 0.0
  %329 = vmatpush2.msra.mxu0 0.0
  %330 = vmatprep.subr.mxu0 0.0
  %331 = vmatpush2.msra.mxu0 0.0
  %332 = vmatprep.subr.mxu0 0.0
  %333 = vmatpush2.msra.mxu0 0.0
  %334 = vmatprep.subr.mxu0 0.0
  %335 = vmatpush2.msra.mxu0 0.0
  %336 = vmatprep.subr.mxu0 0.0
  %337 = vmatpush2.msra.mxu0 0.0
  %338 = vmatprep.subr.mxu0 0.0
  %339 = vmatpush2.msra.mxu0 0.0
  %340 = vmatprep.subr.mxu0 0.0
  %341 = vmatpush2.msra.mxu0 0.0
  %342 = vmatprep.subr.mxu0 0.0
  %343 = vmatpush2.msra.mxu0 0.0
  %344 = vmatprep.subr.mxu0 0.0
  %345 = vmatpush2.msra.mxu0 0.0
  %346 = vmatprep.mubr.f32.mxu0 0.0
  %347 = vmatmul.mubr.f32.gmra.mxu0 %v274
  %v348 = vpop.f32.mrf.mxu0
  %v349 = vadd.f32 %v265, %v348
  %v350 = vpop.f32.mrf.mxu0
  %351 = vmatprep.mubr.f32.mxu0 0.0
  %352 = vmatmul.mubr.f32.gmra.mxu0 %v277
  %v353 = vpop.f32.mrf.mxu0
  %v354 = vadd.f32 %v270, %v353
  %v355 = vpop.f32.mrf.mxu0
  %356 = vdwg.mxu0
  %v357 = vld [vmem:[%s2 + $0x38] sm:$0xf]
  %v359 = vsel %vm187, %v177, 0
  %v362 = vsel %vm187, %v182, 0
  %v365 = vsel %vm194, %v357, 0
  %367 = vmatprep.subr.mxu0 0.0
  %368 = vmatpush1.msra.mxu0 0.0
  %369 = vmatprep.subr.mxu0 0.0
  %370 = vmatpush1.msra.mxu0 0.0
  %371 = vmatprep.subr.mxu0 0.0
  %372 = vmatpush1.msra.mxu0 0.0
  %373 = vmatprep.subr.mxu0 0.0
  %374 = vmatpush1.msra.mxu0 0.0
  %375 = vmatprep.subr.mxu0 0.0
  %376 = vmatpush1.msra.mxu0 0.0
  %377 = vmatprep.subr.mxu0 0.0
  %378 = vmatpush1.msra.mxu0 0.0
  %379 = vmatprep.subr.mxu0 0.0
  %380 = vmatpush1.msra.mxu0 0.0
  %381 = vmatprep.subr.mxu0 0.0
  %382 = vmatpush1.msra.mxu0 0.0
  %383 = vmatprep.subr.mxu0 0.0
  %384 = vmatpush1.msra.mxu0 0.0
  %385 = vmatprep.subr.mxu0 0.0
  %386 = vmatpush1.msra.mxu0 0.0
  %387 = vmatprep.subr.mxu0 0.0
  %388 = vmatpush1.msra.mxu0 0.0
  %389 = vmatprep.subr.mxu0 0.0
  %390 = vmatpush1.msra.mxu0 0.0
  %391 = vmatprep.subr.mxu0 0.0
  %392 = vmatpush1.msra.mxu0 0.0
  %393 = vmatprep.subr.mxu0 0.0
  %394 = vmatpush1.msra.mxu0 0.0
  %395 = vmatprep.subr.mxu0 0.0
  %396 = vmatpush1.msra.mxu0 0.0
  %397 = vmatprep.subr.mxu0 0.0
  %398 = vmatpush1.msra.mxu0 %v365
  %399 = vmatprep.subr.mxu0 0.0
  %400 = vmatpush2.msra.mxu0 0.0
  %401 = vmatprep.subr.mxu0 0.0
  %402 = vmatpush2.msra.mxu0 0.0
  %403 = vmatprep.subr.mxu0 0.0
  %404 = vmatpush2.msra.mxu0 0.0
  %405 = vmatprep.subr.mxu0 0.0
  %406 = vmatpush2.msra.mxu0 0.0
  %407 = vmatprep.subr.mxu0 0.0
  %408 = vmatpush2.msra.mxu0 0.0
  %409 = vmatprep.subr.mxu0 0.0
  %410 = vmatpush2.msra.mxu0 0.0
  %411 = vmatprep.subr.mxu0 0.0
  %412 = vmatpush2.msra.mxu0 0.0
  %413 = vmatprep.subr.mxu0 0.0
  %414 = vmatpush2.msra.mxu0 0.0
  %415 = vmatprep.subr.mxu0 0.0
  %416 = vmatpush2.msra.mxu0 0.0
  %417 = vmatprep.subr.mxu0 0.0
  %418 = vmatpush2.msra.mxu0 0.0
  %419 = vmatprep.subr.mxu0 0.0
  %420 = vmatpush2.msra.mxu0 0.0
  %421 = vmatprep.subr.mxu0 0.0
  %422 = vmatpush2.msra.mxu0 0.0
  %423 = vmatprep.subr.mxu0 0.0
  %424 = vmatpush2.msra.mxu0 0.0
  %425 = vmatprep.subr.mxu0 0.0
  %426 = vmatpush2.msra.mxu0 0.0
  %427 = vmatprep.subr.mxu0 0.0
  %428 = vmatpush2.msra.mxu0 0.0
  %429 = vmatprep.subr.mxu0 0.0
  %430 = vmatpush2.msra.mxu0 0.0
  %431 = vmatprep.mubr.f32.mxu0 0.0
  %432 = vmatmul.mubr.f32.gmra.mxu0 %v359
  %v433 = vpop.f32.mrf.mxu0
  %v434 = vadd.f32 0.0, %v433
  %v435 = vpop.f32.mrf.mxu0
  %436 = vmatprep.mubr.f32.mxu0 0.0
  %437 = vmatmul.mubr.f32.gmra.mxu0 %v362
  %v438 = vpop.f32.mrf.mxu0
  %v439 = vadd.f32 0.0, %v438
  %v440 = vpop.f32.mrf.mxu0
  %441 = vdwg.mxu0
  %v442 = vadd.f32 %v349, %v434
  %v443 = vadd.f32 %v354, %v439
  %v444 = vld [vmem:[%s2 + $0x40] sm:$0xf]
  %v446 = vsel %vm187, %v16, 0
  %v449 = vsel %vm187, %v17, 0
  %v452 = vsel %vm194, %v444, 0
  %454 = vmatprep.subr.mxu0 0.0
  %455 = vmatpush1.msra.mxu0 0.0
  %456 = vmatprep.subr.mxu0 0.0
  %457 = vmatpush1.msra.mxu0 0.0
  %458 = vmatprep.subr.mxu0 0.0
  %459 = vmatpush1.msra.mxu0 0.0
  %460 = vmatprep.subr.mxu0 0.0
  %461 = vmatpush1.msra.mxu0 0.0
  %462 = vmatprep.subr.mxu0 0.0
  %463 = vmatpush1.msra.mxu0 0.0
  %464 = vmatprep.subr.mxu0 0.0
  %465 = vmatpush1.msra.mxu0 0.0
  %466 = vmatprep.subr.mxu0 0.0
  %467 = vmatpush1.msra.mxu0 0.0
  %468 = vmatprep.subr.mxu0 0.0
  %469 = vmatpush1.msra.mxu0 0.0
  %470 = vmatprep.subr.mxu0 0.0
  %471 = vmatpush1.msra.mxu0 0.0
  %472 = vmatprep.subr.mxu0 0.0
  %473 = vmatpush1.msra.mxu0 0.0
  %474 = vmatprep.subr.mxu0 0.0
  %475 = vmatpush1.msra.mxu0 0.0
  %476 = vmatprep.subr.mxu0 0.0
  %477 = vmatpush1.msra.mxu0 0.0
  %478 = vmatprep.subr.mxu0 0.0
  %479 = vmatpush1.msra.mxu0 0.0
  %480 = vmatprep.subr.mxu0 0.0
  %481 = vmatpush1.msra.mxu0 0.0
  %482 = vmatprep.subr.mxu0 0.0
  %483 = vmatpush1.msra.mxu0 0.0
  %484 = vmatprep.subr.mxu0 0.0
  %485 = vmatpush1.msra.mxu0 %v452
  %486 = vmatprep.subr.mxu0 0.0
  %487 = vmatpush2.msra.mxu0 0.0
  %488 = vmatprep.subr.mxu0 0.0
  %489 = vmatpush2.msra.mxu0 0.0
  %490 = vmatprep.subr.mxu0 0.0
  %491 = vmatpush2.msra.mxu0 0.0
  %492 = vmatprep.subr.mxu0 0.0
  %493 = vmatpush2.msra.mxu0 0.0
  %494 = vmatprep.subr.mxu0 0.0
  %495 = vmatpush2.msra.mxu0 0.0
  %496 = vmatprep.subr.mxu0 0.0
  %497 = vmatpush2.msra.mxu0 0.0
  %498 = vmatprep.subr.mxu0 0.0
  %499 = vmatpush2.msra.mxu0 0.0
  %500 = vmatprep.subr.mxu0 0.0
  %501 = vmatpush2.msra.mxu0 0.0
  %502 = vmatprep.subr.mxu0 0.0
  %503 = vmatpush2.msra.mxu0 0.0
  %504 = vmatprep.subr.mxu0 0.0
  %505 = vmatpush2.msra.mxu0 0.0
  %506 = vmatprep.subr.mxu0 0.0
  %507 = vmatpush2.msra.mxu0 0.0
  %508 = vmatprep.subr.mxu0 0.0
  %509 = vmatpush2.msra.mxu0 0.0
  %510 = vmatprep.subr.mxu0 0.0
  %511 = vmatpush2.msra.mxu0 0.0
  %512 = vmatprep.subr.mxu0 0.0
  %513 = vmatpush2.msra.mxu0 0.0
  %514 = vmatprep.subr.mxu0 0.0
  %515 = vmatpush2.msra.mxu0 0.0
  %516 = vmatprep.subr.mxu0 0.0
  %517 = vmatpush2.msra.mxu0 0.0
  %518 = vmatprep.mubr.f32.mxu0 0.0
  %519 = vmatmul.mubr.f32.gmra.mxu0 %v446
  %v520 = vpop.f32.mrf.mxu0
  %v521 = vadd.f32 0.0, %v520
  %v522 = vpop.f32.mrf.mxu0
  %523 = vmatprep.mubr.f32.mxu0 0.0
  %524 = vmatmul.mubr.f32.gmra.mxu0 %v449
  %v525 = vpop.f32.mrf.mxu0
  %v526 = vadd.f32 0.0, %v525
  %v527 = vpop.f32.mrf.mxu0
  %528 = vdwg.mxu0
  %v529 = vadd.f32 %v442, %v521
  %v530 = vadd.f32 %v443, %v526
  %v531 = vld [vmem:[%s2 + $0x48] sm:$0xff]
  %v532 = vld [vmem:[%s2 + $0x50] sm:$0xff]
  %v533 = vadd.f32 %v529, %v531
  %v534 = vadd.f32 %v530, %v532
  %v535 = vld [vmem:[%s2 + $0x58] sm:$0xff]
  %v536 = vld [vmem:[%s2 + $0x60] sm:$0xff]
  %v537 = vld [vmem:[%s2 + $0x68] sm:$0xff]
  %v538 = vld [vmem:[%s2 + $0x70] sm:$0xff]
  %v539 = vld [vmem:[%s2 + $0x98] sm:$0xff]
  %v540 = vld [vmem:[%s2 + $0xa0] sm:$0xff]
  %vm541 = vcmask 261120
  %v543 = vsel %vm541, %v533, 0
  %v546 = vsel %vm541, %v534, 0
  %548 = vmatprep.subr.mxu0 0.0
  %549 = vmatpush1.msra.mxu0 0.0
  %550 = vmatprep.subr.mxu0 0.0
  %551 = vmatpush1.msra.mxu0 0.0
  %552 = vmatprep.subr.mxu0 0.0
  %553 = vmatpush1.msra.mxu0 0.0
  %554 = vmatprep.subr.mxu0 0.0
  %555 = vmatpush1.msra.mxu0 0.0
  %556 = vmatprep.subr.mxu0 0.0
  %557 = vmatpush1.msra.mxu0 0.0
  %558 = vmatprep.subr.mxu0 0.0
  %559 = vmatpush1.msra.mxu0 0.0
  %560 = vmatprep.subr.mxu0 0.0
  %561 = vmatpush1.msra.mxu0 0.0
  %562 = vmatprep.subr.mxu0 0.0
  %563 = vmatpush1.msra.mxu0 0.0
  %564 = vmatprep.subr.mxu0 0.0
  %565 = vmatpush1.msra.mxu0 0.0
  %566 = vmatprep.subr.mxu0 0.0
  %567 = vmatpush1.msra.mxu0 0.0
  %568 = vmatprep.subr.mxu0 0.0
  %569 = vmatpush1.msra.mxu0 0.0
  %570 = vmatprep.subr.mxu0 0.0
  %571 = vmatpush1.msra.mxu0 0.0
  %572 = vmatprep.subr.mxu0 0.0
  %573 = vmatpush1.msra.mxu0 %v538
  %574 = vmatprep.subr.mxu0 0.0
  %575 = vmatpush1.msra.mxu0 %v537
  %576 = vmatprep.subr.mxu0 0.0
  %577 = vmatpush1.msra.mxu0 %v536
  %578 = vmatprep.subr.mxu0 0.0
  %579 = vmatpush1.msra.mxu0 %v535
  %580 = vmatprep.subr.mxu0 0.0
  %581 = vmatpush2.msra.mxu0 0.0
  %582 = vmatprep.subr.mxu0 0.0
  %583 = vmatpush2.msra.mxu0 0.0
  %584 = vmatprep.subr.mxu0 0.0
  %585 = vmatpush2.msra.mxu0 0.0
  %586 = vmatprep.subr.mxu0 0.0
  %587 = vmatpush2.msra.mxu0 0.0
  %588 = vmatprep.subr.mxu0 0.0
  %589 = vmatpush2.msra.mxu0 0.0
  %590 = vmatprep.subr.mxu0 0.0
  %591 = vmatpush2.msra.mxu0 0.0
  %592 = vmatprep.subr.mxu0 0.0
  %593 = vmatpush2.msra.mxu0 0.0
  %594 = vmatprep.subr.mxu0 0.0
  %595 = vmatpush2.msra.mxu0 0.0
  %596 = vmatprep.subr.mxu0 0.0
  %597 = vmatpush2.msra.mxu0 0.0
  %598 = vmatprep.subr.mxu0 0.0
  %599 = vmatpush2.msra.mxu0 0.0
  %600 = vmatprep.subr.mxu0 0.0
  %601 = vmatpush2.msra.mxu0 0.0
  %602 = vmatprep.subr.mxu0 0.0
  %603 = vmatpush2.msra.mxu0 0.0
  %604 = vmatprep.subr.mxu0 0.0
  %605 = vmatpush2.msra.mxu0 0.0
  %606 = vmatprep.subr.mxu0 0.0
  %607 = vmatpush2.msra.mxu0 0.0
  %608 = vmatprep.subr.mxu0 0.0
  %609 = vmatpush2.msra.mxu0 0.0
  %610 = vmatprep.subr.mxu0 0.0
  %611 = vmatpush2.msra.mxu0 0.0
  %612 = vmatprep.mubr.f32.mxu0 0.0
  %613 = vmatmul.mubr.f32.gmra.mxu0 %v543
  %v614 = vpop.f32.mrf.mxu0
  %v615 = vadd.f32 %v539, %v614
  %v616 = vpop.f32.mrf.mxu0
  %617 = vmatprep.mubr.f32.mxu0 0.0
  %618 = vmatmul.mubr.f32.gmra.mxu0 %v546
  %v619 = vpop.f32.mrf.mxu0
  %v620 = vadd.f32 %v540, %v619
  %v621 = vpop.f32.mrf.mxu0
  %622 = vdwg.mxu0
  %v623 = vmax.f32 %v615, 0.0
  %v624 = vmax.f32 %v620, 0.0
  %v625 = vld [vmem:[%s2 + $0x78] sm:$0xff]
  %v626 = vld [vmem:[%s2 + $0x80] sm:$0xff]
  %v627 = vld [vmem:[%s2 + $0x88] sm:$0xff]
  %v628 = vld [vmem:[%s2 + $0x90] sm:$0xff]
  %v629 = vld [vmem:[%s2 + $0xa8] sm:$0xff]
  %v630 = vld [vmem:[%s2 + $0xb0] sm:$0xff]
  %v632 = vsel %vm541, %v623, 0
  %v635 = vsel %vm541, %v624, 0
  %637 = vmatprep.subr.mxu0 0.0
  %638 = vmatpush1.msra.mxu0 0.0
  %639 = vmatprep.subr.mxu0 0.0
  %640 = vmatpush1.msra.mxu0 0.0
  %641 = vmatprep.subr.mxu0 0.0
  %642 = vmatpush1.msra.mxu0 0.0
  %643 = vmatprep.subr.mxu0 0.0
  %644 = vmatpush1.msra.mxu0 0.0
  %645 = vmatprep.subr.mxu0 0.0
  %646 = vmatpush1.msra.mxu0 0.0
  %647 = vmatprep.subr.mxu0 0.0
  %648 = vmatpush1.msra.mxu0 0.0
  %649 = vmatprep.subr.mxu0 0.0
  %650 = vmatpush1.msra.mxu0 0.0
  %651 = vmatprep.subr.mxu0 0.0
  %652 = vmatpush1.msra.mxu0 0.0
  %653 = vmatprep.subr.mxu0 0.0
  %654 = vmatpush1.msra.mxu0 0.0
  %655 = vmatprep.subr.mxu0 0.0
  %656 = vmatpush1.msra.mxu0 0.0
  %657 = vmatprep.subr.mxu0 0.0
  %658 = vmatpush1.msra.mxu0 0.0
  %659 = vmatprep.subr.mxu0 0.0
  %660 = vmatpush1.msra.mxu0 0.0
  %661 = vmatprep.subr.mxu0 0.0
  %662 = vmatpush1.msra.mxu0 %v628
  %663 = vmatprep.subr.mxu0 0.0
  %664 = vmatpush1.msra.mxu0 %v627
  %665 = vmatprep.subr.mxu0 0.0
  %666 = vmatpush1.msra.mxu0 %v626
  %667 = vmatprep.subr.mxu0 0.0
  %668 = vmatpush1.msra.mxu0 %v625
  %669 = vmatprep.subr.mxu0 0.0
  %670 = vmatpush2.msra.mxu0 0.0
  %671 = vmatprep.subr.mxu0 0.0
  %672 = vmatpush2.msra.mxu0 0.0
  %673 = vmatprep.subr.mxu0 0.0
  %674 = vmatpush2.msra.mxu0 0.0
  %675 = vmatprep.subr.mxu0 0.0
  %676 = vmatpush2.msra.mxu0 0.0
  %677 = vmatprep.subr.mxu0 0.0
  %678 = vmatpush2.msra.mxu0 0.0
  %679 = vmatprep.subr.mxu0 0.0
  %680 = vmatpush2.msra.mxu0 0.0
  %681 = vmatprep.subr.mxu0 0.0
  %682 = vmatpush2.msra.mxu0 0.0
  %683 = vmatprep.subr.mxu0 0.0
  %684 = vmatpush2.msra.mxu0 0.0
  %685 = vmatprep.subr.mxu0 0.0
  %686 = vmatpush2.msra.mxu0 0.0
  %687 = vmatprep.subr.mxu0 0.0
  %688 = vmatpush2.msra.mxu0 0.0
  %689 = vmatprep.subr.mxu0 0.0
  %690 = vmatpush2.msra.mxu0 0.0
  %691 = vmatprep.subr.mxu0 0.0
  %692 = vmatpush2.msra.mxu0 0.0
  %693 = vmatprep.subr.mxu0 0.0
  %694 = vmatpush2.msra.mxu0 0.0
  %695 = vmatprep.subr.mxu0 0.0
  %696 = vmatpush2.msra.mxu0 0.0
  %697 = vmatprep.subr.mxu0 0.0
  %698 = vmatpush2.msra.mxu0 0.0
  %699 = vmatprep.subr.mxu0 0.0
  %700 = vmatpush2.msra.mxu0 0.0
  %701 = vmatprep.mubr.f32.mxu0 0.0
  %702 = vmatmul.mubr.f32.gmra.mxu0 %v632
  %v703 = vpop.f32.mrf.mxu0
  %v704 = vadd.f32 %v629, %v703
  %v705 = vpop.f32.mrf.mxu0
  %706 = vmatprep.mubr.f32.mxu0 0.0
  %707 = vmatmul.mubr.f32.gmra.mxu0 %v635
  %v708 = vpop.f32.mrf.mxu0
  %v709 = vadd.f32 %v630, %v708
  %v710 = vpop.f32.mrf.mxu0
  %711 = vdwg.mxu0
  %v712 = vmax.f32 %v704, 0.0
  %v713 = vmax.f32 %v709, 0.0
  %v714 = vld [vmem:[%s2 + $0xb8] sm:$0xff]
  %v715 = vld [vmem:[%s2 + $0xc0] sm:$0xff]
  %v716 = vld [vmem:[%s2 + $0xc8] sm:$0xff]
  %v717 = vld [vmem:[%s2 + $0xd0] sm:$0xff]
  %v718 = vld [vmem:[%s2 + $0xd8] sm:$0xff]
  %v719 = vld [vmem:[%s2 + $0xe0] sm:$0xff]
  %v721 = vsel %vm541, %v712, 0
  %v724 = vsel %vm541, %v713, 0
  %726 = vmatprep.subr.mxu0 0.0
  %727 = vmatpush1.msra.mxu0 0.0
  %728 = vmatprep.subr.mxu0 0.0
  %729 = vmatpush1.msra.mxu0 0.0
  %730 = vmatprep.subr.mxu0 0.0
  %731 = vmatpush1.msra.mxu0 0.0
  %732 = vmatprep.subr.mxu0 0.0
  %733 = vmatpush1.msra.mxu0 0.0
  %734 = vmatprep.subr.mxu0 0.0
  %735 = vmatpush1.msra.mxu0 0.0
  %736 = vmatprep.subr.mxu0 0.0
  %737 = vmatpush1.msra.mxu0 0.0
  %738 = vmatprep.subr.mxu0 0.0
  %739 = vmatpush1.msra.mxu0 0.0
  %740 = vmatprep.subr.mxu0 0.0
  %741 = vmatpush1.msra.mxu0 0.0
  %742 = vmatprep.subr.mxu0 0.0
  %743 = vmatpush1.msra.mxu0 0.0
  %744 = vmatprep.subr.mxu0 0.0
  %745 = vmatpush1.msra.mxu0 0.0
  %746 = vmatprep.subr.mxu0 0.0
  %747 = vmatpush1.msra.mxu0 0.0
  %748 = vmatprep.subr.mxu0 0.0
  %749 = vmatpush1.msra.mxu0 0.0
  %750 = vmatprep.subr.mxu0 0.0
  %751 = vmatpush1.msra.mxu0 %v717
  %752 = vmatprep.subr.mxu0 0.0
  %753 = vmatpush1.msra.mxu0 %v716
  %754 = vmatprep.subr.mxu0 0.0
  %755 = vmatpush1.msra.mxu0 %v715
  %756 = vmatprep.subr.mxu0 0.0
  %757 = vmatpush1.msra.mxu0 %v714
  %758 = vmatprep.subr.mxu0 0.0
  %759 = vmatpush2.msra.mxu0 0.0
  %760 = vmatprep.subr.mxu0 0.0
  %761 = vmatpush2.msra.mxu0 0.0
  %762 = vmatprep.subr.mxu0 0.0
  %763 = vmatpush2.msra.mxu0 0.0
  %764 = vmatprep.subr.mxu0 0.0
  %765 = vmatpush2.msra.mxu0 0.0
  %766 = vmatprep.subr.mxu0 0.0
  %767 = vmatpush2.msra.mxu0 0.0
  %768 = vmatprep.subr.mxu0 0.0
  %769 = vmatpush2.msra.mxu0 0.0
  %770 = vmatprep.subr.mxu0 0.0
  %771 = vmatpush2.msra.mxu0 0.0
  %772 = vmatprep.subr.mxu0 0.0
  %773 = vmatpush2.msra.mxu0 0.0
  %774 = vmatprep.subr.mxu0 0.0
  %775 = vmatpush2.msra.mxu0 0.0
  %776 = vmatprep.subr.mxu0 0.0
  %777 = vmatpush2.msra.mxu0 0.0
  %778 = vmatprep.subr.mxu0 0.0
  %779 = vmatpush2.msra.mxu0 0.0
  %780 = vmatprep.subr.mxu0 0.0
  %781 = vmatpush2.msra.mxu0 0.0
  %782 = vmatprep.subr.mxu0 0.0
  %783 = vmatpush2.msra.mxu0 0.0
  %784 = vmatprep.subr.mxu0 0.0
  %785 = vmatpush2.msra.mxu0 0.0
  %786 = vmatprep.subr.mxu0 0.0
  %787 = vmatpush2.msra.mxu0 0.0
  %788 = vmatprep.subr.mxu0 0.0
  %789 = vmatpush2.msra.mxu0 0.0
  %790 = vmatprep.mubr.f32.mxu0 0.0
  %791 = vmatmul.mubr.f32.gmra.mxu0 %v721
  %v792 = vpop.f32.mrf.mxu0
  %v793 = vadd.f32 %v718, %v792
  %v794 = vpop.f32.mrf.mxu0
  %795 = vmatprep.mubr.f32.mxu0 0.0
  %796 = vmatmul.mubr.f32.gmra.mxu0 %v724
  %v797 = vpop.f32.mrf.mxu0
  %v798 = vadd.f32 %v719, %v797
  %v799 = vpop.f32.mrf.mxu0
  %800 = vdwg.mxu0
  %v801 = vmax.f32 %v793, 0.0
  %v802 = vmax.f32 %v798, 0.0
  %v803 = vld [vmem:[%s2 + $0xe8] sm:$0xff]
  %v804 = vld [vmem:[%s2 + $0xf0] sm:$0xff]
  %v805 = vld [vmem:[%s2 + $0xf8] sm:$0xff]
  %v806 = vld [vmem:[%s2 + $0x100] sm:$0xff]
  %v807 = vld [vmem:[%s2 + $0x108] sm:$0xff]
  %v808 = vld [vmem:[%s2 + $0x110] sm:$0xff]
  %v810 = vsel %vm541, %v801, 0
  %v813 = vsel %vm541, %v802, 0
  %815 = vmatprep.subr.mxu0 0.0
  %816 = vmatpush1.msra.mxu0 0.0
  %817 = vmatprep.subr.mxu0 0.0
  %818 = vmatpush1.msra.mxu0 0.0
  %819 = vmatprep.subr.mxu0 0.0
  %820 = vmatpush1.msra.mxu0 0.0
  %821 = vmatprep.subr.mxu0 0.0
  %822 = vmatpush1.msra.mxu0 0.0
  %823 = vmatprep.subr.mxu0 0.0
  %824 = vmatpush1.msra.mxu0 0.0
  %825 = vmatprep.subr.mxu0 0.0
  %826 = vmatpush1.msra.mxu0 0.0
  %827 = vmatprep.subr.mxu0 0.0
  %828 = vmatpush1.msra.mxu0 0.0
  %829 = vmatprep.subr.mxu0 0.0
  %830 = vmatpush1.msra.mxu0 0.0
  %831 = vmatprep.subr.mxu0 0.0
  %832 = vmatpush1.msra.mxu0 0.0
  %833 = vmatprep.subr.mxu0 0.0
  %834 = vmatpush1.msra.mxu0 0.0
  %835 = vmatprep.subr.mxu0 0.0
  %836 = vmatpush1.msra.mxu0 0.0
  %837 = vmatprep.subr.mxu0 0.0
  %838 = vmatpush1.msra.mxu0 0.0
  %839 = vmatprep.subr.mxu0 0.0
  %840 = vmatpush1.msra.mxu0 %v806
  %841 = vmatprep.subr.mxu0 0.0
  %842 = vmatpush1.msra.mxu0 %v805
  %843 = vmatprep.subr.mxu0 0.0
  %844 = vmatpush1.msra.mxu0 %v804
  %845 = vmatprep.subr.mxu0 0.0
  %846 = vmatpush1.msra.mxu0 %v803
  %847 = vmatprep.subr.mxu0 0.0
  %848 = vmatpush2.msra.mxu0 0.0
  %849 = vmatprep.subr.mxu0 0.0
  %850 = vmatpush2.msra.mxu0 0.0
  %851 = vmatprep.subr.mxu0 0.0
  %852 = vmatpush2.msra.mxu0 0.0
  %853 = vmatprep.subr.mxu0 0.0
  %854 = vmatpush2.msra.mxu0 0.0
  %855 = vmatprep.subr.mxu0 0.0
  %856 = vmatpush2.msra.mxu0 0.0
  %857 = vmatprep.subr.mxu0 0.0
  %858 = vmatpush2.msra.mxu0 0.0
  %859 = vmatprep.subr.mxu0 0.0
  %860 = vmatpush2.msra.mxu0 0.0
  %861 = vmatprep.subr.mxu0 0.0
  %862 = vmatpush2.msra.mxu0 0.0
  %863 = vmatprep.subr.mxu0 0.0
  %864 = vmatpush2.msra.mxu0 0.0
  %865 = vmatprep.subr.mxu0 0.0
  %866 = vmatpush2.msra.mxu0 0.0
  %867 = vmatprep.subr.mxu0 0.0
  %868 = vmatpush2.msra.mxu0 0.0
  %869 = vmatprep.subr.mxu0 0.0
  %870 = vmatpush2.msra.mxu0 0.0
  %871 = vmatprep.subr.mxu0 0.0
  %872 = vmatpush2.msra.mxu0 0.0
  %873 = vmatprep.subr.mxu0 0.0
  %874 = vmatpush2.msra.mxu0 0.0
  %875 = vmatprep.subr.mxu0 0.0
  %876 = vmatpush2.msra.mxu0 0.0
  %877 = vmatprep.subr.mxu0 0.0
  %878 = vmatpush2.msra.mxu0 0.0
  %879 = vmatprep.mubr.f32.mxu0 0.0
  %880 = vmatmul.mubr.f32.gmra.mxu0 %v810
  %v881 = vpop.f32.mrf.mxu0
  %v882 = vadd.f32 %v807, %v881
  %v883 = vpop.f32.mrf.mxu0
  %884 = vmatprep.mubr.f32.mxu0 0.0
  %885 = vmatmul.mubr.f32.gmra.mxu0 %v813
  %v886 = vpop.f32.mrf.mxu0
  %v887 = vadd.f32 %v808, %v886
  %v888 = vpop.f32.mrf.mxu0
  %889 = vdwg.mxu0
  %v890 = vld [vmem:[%s2 + $0x20] sm:$0x3]
  %v892 = vsel %vm20, %v890, 0
  %894 = vmatprep.subr.mxu0 0.0
  %895 = vmatpush1.msra.mxu0 0.0
  %896 = vmatprep.subr.mxu0 0.0
  %897 = vmatpush1.msra.mxu0 0.0
  %898 = vmatprep.subr.mxu0 0.0
  %899 = vmatpush1.msra.mxu0 0.0
  %900 = vmatprep.subr.mxu0 0.0
  %901 = vmatpush1.msra.mxu0 0.0
  %902 = vmatprep.subr.mxu0 0.0
  %903 = vmatpush1.msra.mxu0 0.0
  %904 = vmatprep.subr.mxu0 0.0
  %905 = vmatpush1.msra.mxu0 0.0
  %906 = vmatprep.subr.mxu0 0.0
  %907 = vmatpush1.msra.mxu0 0.0
  %908 = vmatprep.subr.mxu0 0.0
  %909 = vmatpush1.msra.mxu0 0.0
  %910 = vmatprep.subr.mxu0 0.0
  %911 = vmatpush1.msra.mxu0 0.0
  %912 = vmatprep.subr.mxu0 0.0
  %913 = vmatpush1.msra.mxu0 0.0
  %914 = vmatprep.subr.mxu0 0.0
  %915 = vmatpush1.msra.mxu0 0.0
  %916 = vmatprep.subr.mxu0 0.0
  %917 = vmatpush1.msra.mxu0 0.0
  %918 = vmatprep.subr.mxu0 0.0
  %919 = vmatpush1.msra.mxu0 0.0
  %920 = vmatprep.subr.mxu0 0.0
  %921 = vmatpush1.msra.mxu0 0.0
  %922 = vmatprep.subr.mxu0 0.0
  %923 = vmatpush1.msra.mxu0 %v887
  %924 = vmatprep.subr.mxu0 0.0
  %925 = vmatpush1.msra.mxu0 %v882
  %926 = vmatprep.subr.mxu0 0.0
  %927 = vmatpush2.msra.mxu0 0.0
  %928 = vmatprep.subr.mxu0 0.0
  %929 = vmatpush2.msra.mxu0 0.0
  %930 = vmatprep.subr.mxu0 0.0
  %931 = vmatpush2.msra.mxu0 0.0
  %932 = vmatprep.subr.mxu0 0.0
  %933 = vmatpush2.msra.mxu0 0.0
  %934 = vmatprep.subr.mxu0 0.0
  %935 = vmatpush2.msra.mxu0 0.0
  %936 = vmatprep.subr.mxu0 0.0
  %937 = vmatpush2.msra.mxu0 0.0
  %938 = vmatprep.subr.mxu0 0.0
  %939 = vmatpush2.msra.mxu0 0.0
  %940 = vmatprep.subr.mxu0 0.0
  %941 = vmatpush2.msra.mxu0 0.0
  %942 = vmatprep.subr.mxu0 0.0
  %943 = vmatpush2.msra.mxu0 0.0
  %944 = vmatprep.subr.mxu0 0.0
  %945 = vmatpush2.msra.mxu0 0.0
  %946 = vmatprep.subr.mxu0 0.0
  %947 = vmatpush2.msra.mxu0 0.0
  %948 = vmatprep.subr.mxu0 0.0
  %949 = vmatpush2.msra.mxu0 0.0
  %950 = vmatprep.subr.mxu0 0.0
  %951 = vmatpush2.msra.mxu0 0.0
  %952 = vmatprep.subr.mxu0 0.0
  %953 = vmatpush2.msra.mxu0 0.0
  %954 = vmatprep.subr.mxu0 0.0
  %955 = vmatpush2.msra.mxu0 0.0
  %956 = vmatprep.subr.mxu0 0.0
  %957 = vmatpush2.msra.mxu0 0.0
  %958 = vmatprep.mubr.f32.mxu0 0.0
  %959 = vmatmul.mubr.f32.gmra.mxu0 %v892
  %v960 = vpop.f32.mrf.mxu0
  %v961 = vadd.f32 0.0, %v960
  %v962 = vpop.f32.mrf.mxu0
  %963 = vdwg.mxu0
  %vm964 = vcmask 123904
  %965 = vst.msk [vmem:[%s3] sm:$0x3] %vm964, %v961
  // Predicated region
  $region14: #{ann_forward.1} parent=0 // pred_check
    _
  $region15: #{ann_forward.1} parent=0 // pred_check_branch
    %967 = sbr.rel (0) target = $region17
  $region16: #{ann_forward.1} parent=0 // pred_region
    _
  $region17: #{ann_forward.1} parent=0 // pred_fallthru
    _
  // Predicated region
  $region18: #{ann_forward.1} parent=0 // pred_check
    _
  $region19: #{ann_forward.1} parent=0 // pred_check_branch
    %969 = sbr.rel (0) target = $region21
  $region20: #{ann_forward.1} parent=0 // pred_region
    _
  $region21: #{ann_forward.1} parent=0 // pred_fallthru
    _

</llo_original>
